<compile_context>
chip_gen: v5e
topology: v5e:2x2
jax: 0.10.0
libtpu: 0.0.40
codegen_flags: <defaults>
</compile_context>

<pallas_src>
import functools

import jax
import jax.numpy as jnp
from jax.experimental import pallas as pl
from jax.experimental.pallas import tpu as pltpu

LANE = 128
SUB = 8
EPS = 1e-6


def _jaccard_kernel(pred_ref, gt_ref, inter_ref, tot_ref, *,
                    apply_sigmoid, block_rows, rows, cps, need_mask):
    """Accumulate partial sum(p*g) and sum(p+g) for one (batch, split) pair.

    pred_ref / gt_ref : (1, block_rows, LANE) input tiles (native dtype).
    inter_ref/tot_ref : (1, 1, out_sub, LANE) f32 output blocks, resident in
                        VMEM across the k (reduction) grid axis and used as
                        vector accumulators.
    """
    k = pl.program_id(2)

    @pl.when(k == 0)
    def _():
        inter_ref[...] = jnp.zeros_like(inter_ref)
        tot_ref[...] = jnp.zeros_like(tot_ref)

    p = pred_ref[...].astype(jnp.float32)
    if apply_sigmoid:
        p = jax.nn.sigmoid(p)
    g = gt_ref[...].astype(jnp.float32)

    if need_mask:
        # Rows past `rows` (partial boundary block, or a duplicated block the
        # index_map clamped back in range) contribute zero.
        s = pl.program_id(1)
        row_start = (s * cps + k) * block_rows
        row_idx = row_start + jax.lax.broadcasted_iota(
            jnp.int32, (1, block_rows, LANE), 1)
        valid = row_idx < rows
        p = jnp.where(valid, p, 0.0)
        g = jnp.where(valid, g, 0.0)

    if block_rows % SUB == 0:
        # Reduce block_rows -> SUB with pure element-wise (VALU) adds; the
        # cross-lane/sublane reduce happens once, in the wrapper.
        n_groups = block_rows // SUB
        pg = jnp.sum((p * g).reshape(n_groups, SUB, LANE), axis=0)[None, None]
        ps = jnp.sum((p + g).reshape(n_groups, SUB, LANE), axis=0)[None, None]
    else:
        # Tiny single-chunk fallback (block_rows == rows < 8*k): one sublane
        # reduce per kernel invocation, accumulator is (1, LANE).
        pg = jnp.sum(p * g, axis=1, keepdims=True)[:, None]
        ps = jnp.sum(p + g, axis=1, keepdims=True)[:, None]

    inter_ref[...] += pg
    tot_ref[...] += ps


def jaccard_loss(pred, gt, *, per_volume=False, apply_sigmoid=True,
                 block_rows=2048):
    """Pallas implementation of JaccardLoss.forward (pred: (B, 1, H, W))."""
    assert pred.shape[1] == 1, "this loss works with a binary prediction"
    batch = pred.shape[0]
    b_eff = batch if per_volume else 1

    n = pred.size // b_eff
    pred_f = pred.reshape(b_eff, n)   # native dtype, no wrapper up-cast
    gt_f = gt.reshape(b_eff, n)

    # Only pad the ragged lane tail (n % 128 != 0).  The common case (H*W a
    # multiple of 128) streams straight from HBM with no extra copy.  Padded
    # values contribute exactly zero to both sums.
    if n % LANE != 0:
        pad = LANE - n % LANE
        pad_val = -1e30 if apply_sigmoid else 0.0   # sigmoid(-1e30) == 0
        pred_f = jnp.pad(pred_f, ((0, 0), (0, pad)), constant_values=pad_val)
        gt_f = jnp.pad(gt_f, ((0, 0), (0, pad)), constant_values=0)
    rows = pred_f.shape[1] // LANE

    pred_3 = pred_f.reshape(b_eff, rows, LANE)
    gt_3 = gt_f.reshape(b_eff, rows, LANE)

    # Block sizing: biggest block that comfortably fits scoped VMEM on all
    # generations (default 2048 rows -> 1 MiB f32 per input block).
    if rows <= block_rows:
        br = rows
    else:
        br = max(SUB, (block_rows // SUB) * SUB)
    chunks_total = pl.cdiv(rows, br)

    # With per_volume=False there is no parallel batch axis; split the chunk
    # range over a 2-wide "parallel" axis so v7x's two TensorCores both
    # stream HBM.  On single-core v5e/v6e this is just two grid entries.
    n_split = 2 if (b_eff == 1 and chunks_total >= 2) else 1
    cps = pl.cdiv(chunks_total, n_split)          # chunks per split
    need_mask = (n_split * cps * br) != rows

    out_sub = SUB if br % SUB == 0 else 1

    kernel = functools.partial(
        _jaccard_kernel, apply_sigmoid=apply_sigmoid, block_rows=br,
        rows=rows, cps=cps, need_mask=need_mask)

    def in_map(b, s, k):
        # Clamp duplicated (out-of-range) chunk indices back in range; their
        # contribution is zeroed by the in-kernel row mask.
        return (b, jnp.minimum(s * cps + k, chunks_total - 1), 0)

    partial_shape = jax.ShapeDtypeStruct((b_eff, n_split, out_sub, LANE),
                                         jnp.float32)

    inter_p, tot_p = pl.pallas_call(
        kernel,
        out_shape=(partial_shape, partial_shape),
        grid=(b_eff, n_split, cps),
        in_specs=[
            pl.BlockSpec((1, br, LANE), in_map),
            pl.BlockSpec((1, br, LANE), in_map),
        ],
        out_specs=(
            pl.BlockSpec((1, 1, out_sub, LANE), lambda b, s, k: (b, s, 0, 0)),
            pl.BlockSpec((1, 1, out_sub, LANE), lambda b, s, k: (b, s, 0, 0)),
        ),
        compiler_params=pltpu.CompilerParams(
            dimension_semantics=("parallel", "parallel", "arbitrary")),
    )(pred_3, gt_3)

    # Tiny scalar finalize (matches the torch formula).
    inter = jnp.sum(inter_p, axis=(1, 2, 3))
    total = jnp.sum(tot_p, axis=(1, 2, 3))
    union = total - inter
    # Matches torch: shape (1,) when per_volume=False, else (batch,).
    return 1.0 - (inter + EPS) / (union + EPS)


def _reference(pred, gt, *, per_volume=False, apply_sigmoid=True):
    batch = pred.shape[0] if per_volume else 1
    p = pred.astype(jnp.float32)
    if apply_sigmoid:
        p = jax.nn.sigmoid(p)
    p = p.reshape(batch, -1)
    g = gt.reshape(batch, -1).astype(jnp.float32)
    inter = jnp.sum(p * g, axis=1)
    union = jnp.sum(p + g, axis=1) - inter
    return 1.0 - (inter + EPS) / (union + EPS)


if __name__ == "__main__":
    key = jax.random.PRNGKey(0)
    k1, k2 = jax.random.split(key)

    # Small NCHW binary-segmentation example: raw logits + {0,1} mask.
    pred = jax.random.normal(k1, (2, 1, 16, 16), dtype=jnp.float32)
    gt = (jax.random.uniform(k2, (2, 1, 16, 16)) > 0.5).astype(jnp.float32)

    loss = jaccard_loss(pred, gt)
    jax.block_until_ready(loss)
    ref = _reference(pred, gt)
    assert loss.shape == ref.shape == (1,)
    assert jnp.allclose(loss, ref, atol=1e-5, rtol=1e-5), (loss, ref)

    # per_volume=True path (per-sample loss).
    loss_v = jaccard_loss(pred, gt, per_volume=True)
    jax.block_until_ready(loss_v)
    ref_v = _reference(pred, gt, per_volume=True)
    assert loss_v.shape == (2,)
    assert jnp.allclose(loss_v, ref_v, atol=1e-5, rtol=1e-5), (loss_v, ref_v)

    # Exercise the chunked / two-core-split / masked-tail path with a tiny
    # block size (same code path large images take with the default 2048).
    k3, k4 = jax.random.split(k2)
    pred2 = jax.random.normal(k3, (1, 1, 40, 64), dtype=jnp.float32)
    gt2 = (jax.random.uniform(k4, (1, 1, 40, 64)) > 0.5).astype(jnp.float32)
    loss2 = jaccard_loss(pred2, gt2, block_rows=8)
    jax.block_until_ready(loss2)
    ref2 = _reference(pred2, gt2)
    assert jnp.allclose(loss2, ref2, atol=1e-5, rtol=1e-5), (loss2, ref2)

    print("KERNEL_OK")
</pallas_src>

<mosaic_0001>
module attributes {stable_mosaic.version = 11 : i64} {
  func.func @_jaccard_kernel(%arg0: i32, %arg1: i32, %arg2: i32, %arg3: memref<1x4x128xf32, #tpu.memory_space<vmem>>, %arg4: memref<1x4x128xf32, #tpu.memory_space<vmem>>, %arg5: memref<1x1x1x128xf32, #tpu.memory_space<vmem>>, %arg6: memref<1x1x1x128xf32, #tpu.memory_space<vmem>>) attributes {dimension_semantics = [#tpu.dimension_semantics<parallel>, #tpu.dimension_semantics<parallel>, #tpu.dimension_semantics<arbitrary>], iteration_bounds = array<i64: 1, 1, 1>, scalar_prefetch = 0 : i64, scratch_operands = 0 : i64, tpu.core_type = #tpu.core_type<tc>, window_params = [{transform_indices = @transform_0, window_bounds = array<i64: 1, 4, 128>}, {transform_indices = @transform_1, window_bounds = array<i64: 1, 4, 128>}, {transform_indices = @transform_2, window_bounds = array<i64: 1, 1, 1, 128>}, {transform_indices = @transform_3, window_bounds = array<i64: 1, 1, 1, 128>}]} {
    %c0_i32 = arith.constant 0 : i32
    %0 = arith.cmpi eq, %arg2, %c0_i32 : i32
    %1 = arith.extui %0 : i1 to i32
    %c0_i32_0 = arith.constant 0 : i32
    %2 = arith.cmpi ne, %1, %c0_i32_0 : i32
    scf.if %2 {
      %cst_24 = arith.constant 0.000000e+00 : f32
      %24 = vector.broadcast %cst_24 : f32 to vector<1x1x1x128xf32>
      %c0_25 = arith.constant 0 : index
      %c0_26 = arith.constant 0 : index
      %c0_27 = arith.constant 0 : index
      %c0_28 = arith.constant 0 : index
      %25 = vector.load %arg5[%c0_25, %c0_26, %c0_27, %c0_28] : memref<1x1x1x128xf32, #tpu.memory_space<vmem>>, vector<1x1x1x128xf32>
      tpu.vector_store %arg5[%c0_25, %c0_26, %c0_27, %c0_28], %24 {strides = array<i32>} : memref<1x1x1x128xf32, #tpu.memory_space<vmem>>, vector<1x1x1x128xf32>,
      %cst_29 = arith.constant 0.000000e+00 : f32
      %26 = vector.broadcast %cst_29 : f32 to vector<1x1x1x128xf32>
      %c0_30 = arith.constant 0 : index
      %c0_31 = arith.constant 0 : index
      %c0_32 = arith.constant 0 : index
      %c0_33 = arith.constant 0 : index
      %27 = vector.load %arg6[%c0_30, %c0_31, %c0_32, %c0_33] : memref<1x1x1x128xf32, #tpu.memory_space<vmem>>, vector<1x1x1x128xf32>
      tpu.vector_store %arg6[%c0_30, %c0_31, %c0_32, %c0_33], %26 {strides = array<i32>} : memref<1x1x1x128xf32, #tpu.memory_space<vmem>>, vector<1x1x1x128xf32>,
    } else {
    }
    %c0 = arith.constant 0 : index
    %c0_1 = arith.constant 0 : index
    %c0_2 = arith.constant 0 : index
    %3 = vector.load %arg3[%c0, %c0_1, %c0_2] : memref<1x4x128xf32, #tpu.memory_space<vmem>>, vector<1x4x128xf32>
    %4 = arith.negf %3 : vector<1x4x128xf32>
    %5 = math.exp %4 : vector<1x4x128xf32>
    %cst = arith.constant 1.000000e+00 : f32
    %6 = vector.broadcast %cst : f32 to vector<1x4x128xf32>
    %7 = arith.addf %6, %5 : vector<1x4x128xf32>
    %8 = arith.divf %6, %7 : vector<1x4x128xf32>
    %c0_3 = arith.constant 0 : index
    %c0_4 = arith.constant 0 : index
    %c0_5 = arith.constant 0 : index
    %9 = vector.load %arg4[%c0_3, %c0_4, %c0_5] : memref<1x4x128xf32, #tpu.memory_space<vmem>>, vector<1x4x128xf32>
    %10 = arith.mulf %8, %9 : vector<1x4x128xf32>
    %cst_6 = arith.constant dense<0.000000e+00> : vector<1x128xf32>
    %11 = vector.multi_reduction <add>, %10, %cst_6 [1] : vector<1x4x128xf32> to vector<1x128xf32>
    %12 = vector.shape_cast %11 : vector<1x128xf32> to vector<1x1x128xf32>
    %13 = vector.shape_cast %12 : vector<1x1x128xf32> to vector<1x1x1x128xf32>
    %14 = arith.addf %8, %9 : vector<1x4x128xf32>
    %cst_7 = arith.constant dense<0.000000e+00> : vector<1x128xf32>
    %15 = vector.multi_reduction <add>, %14, %cst_7 [1] : vector<1x4x128xf32> to vector<1x128xf32>
    %16 = vector.shape_cast %15 : vector<1x128xf32> to vector<1x1x128xf32>
    %17 = vector.shape_cast %16 : vector<1x1x128xf32> to vector<1x1x1x128xf32>
    %c0_8 = arith.constant 0 : index
    %c0_9 = arith.constant 0 : index
    %c0_10 = arith.constant 0 : index
    %c0_11 = arith.constant 0 : index
    %18 = vector.load %arg5[%c0_8, %c0_9, %c0_10, %c0_11] : memref<1x1x1x128xf32, #tpu.memory_space<vmem>>, vector<1x1x1x128xf32>
    %19 = arith.addf %18, %13 : vector<1x1x1x128xf32>
    %c0_12 = arith.constant 0 : index
    %c0_13 = arith.constant 0 : index
    %c0_14 = arith.constant 0 : index
    %c0_15 = arith.constant 0 : index
    %20 = vector.load %arg5[%c0_12, %c0_13, %c0_14, %c0_15] : memref<1x1x1x128xf32, #tpu.memory_space<vmem>>, vector<1x1x1x128xf32>
    tpu.vector_store %arg5[%c0_12, %c0_13, %c0_14, %c0_15], %19 {strides = array<i32>} : memref<1x1x1x128xf32, #tpu.memory_space<vmem>>, vector<1x1x1x128xf32>,
    %c0_16 = arith.constant 0 : index
    %c0_17 = arith.constant 0 : index
    %c0_18 = arith.constant 0 : index
    %c0_19 = arith.constant 0 : index
    %21 = vector.load %arg6[%c0_16, %c0_17, %c0_18, %c0_19] : memref<1x1x1x128xf32, #tpu.memory_space<vmem>>, vector<1x1x1x128xf32>
    %22 = arith.addf %21, %17 : vector<1x1x1x128xf32>
    %c0_20 = arith.constant 0 : index
    %c0_21 = arith.constant 0 : index
    %c0_22 = arith.constant 0 : index
    %c0_23 = arith.constant 0 : index
    %23 = vector.load %arg6[%c0_20, %c0_21, %c0_22, %c0_23] : memref<1x1x1x128xf32, #tpu.memory_space<vmem>>, vector<1x1x1x128xf32>
    tpu.vector_store %arg6[%c0_20, %c0_21, %c0_22, %c0_23], %22 {strides = array<i32>} : memref<1x1x1x128xf32, #tpu.memory_space<vmem>>, vector<1x1x1x128xf32>,
    return
  }
  func.func @transform_0(%arg0: i32, %arg1: i32, %arg2: i32) -> (i32, i32, i32) {
    %c1_i32 = arith.constant 1 : i32
    %0 = arith.muli %arg1, %c1_i32 : i32
    %1 = arith.addi %0, %arg2 : i32
    %c0_i32 = arith.constant 0 : i32
    %2 = arith.minsi %1, %c0_i32 : i32
    %c0_i32_0 = arith.constant 0 : i32
    %c0_i32_1 = arith.constant 0 : i32
    return %arg0, %2, %c0_i32_0 : i32, i32, i32
  }
  func.func @transform_1(%arg0: i32, %arg1: i32, %arg2: i32) -> (i32, i32, i32) {
    %c1_i32 = arith.constant 1 : i32
    %0 = arith.muli %arg1, %c1_i32 : i32
    %1 = arith.addi %0, %arg2 : i32
    %c0_i32 = arith.constant 0 : i32
    %2 = arith.minsi %1, %c0_i32 : i32
    %c0_i32_0 = arith.constant 0 : i32
    %c0_i32_1 = arith.constant 0 : i32
    return %arg0, %2, %c0_i32_0 : i32, i32, i32
  }
  func.func @transform_2(%arg0: i32, %arg1: i32, %arg2: i32) -> (i32, i32, i32, i32) {
    %c0_i32 = arith.constant 0 : i32
    %c0_i32_0 = arith.constant 0 : i32
    %c0_i32_1 = arith.constant 0 : i32
    return %arg0, %arg1, %c0_i32, %c0_i32_0 : i32, i32, i32, i32
  }
  func.func @transform_3(%arg0: i32, %arg1: i32, %arg2: i32) -> (i32, i32, i32, i32) {
    %c0_i32 = arith.constant 0 : i32
    %c0_i32_0 = arith.constant 0 : i32
    %c0_i32_1 = arith.constant 0 : i32
    return %arg0, %arg1, %c0_i32, %c0_i32_0 : i32, i32, i32, i32
  }
}

</mosaic_0001>

<llo_original>
// kernel: tpu_custom_call.1
$region0: #{tpu_custom_call.1}
  #allocation0 [shape = 'u32[]', space=smem, size = 0x4, offset = 0x4, fixed_abs, tag = 'smem constant byte address 0x4 - core index']
  #allocation1 [shape = 'u32[72,128]{1,0:T(1,128)}', space=vmem, size = 0x9000, scoped, tag = 'internal scratch']
  %s0 = inlined_call_operand.hbm [shape: f32[1,4,128], index: 0, kind: input, shape index: {}]
  %s1 = inlined_call_operand.hbm [shape: f32[1,4,128], index: 1, kind: input, shape index: {}]
  %s2 = inlined_call_operand.hbm [shape: f32[1,1,1,128], index: 2, kind: output, shape index: {0}]
  %s3 = inlined_call_operand.hbm [shape: f32[1,1,1,128], index: 3, kind: output, shape index: {1}]
  %4 = xla_tuple %s2, %s3
  %s5 = sld [smem:[#allocation0]]
  $region38: #{tpu_custom_call.1} parent=0
    _
  %s7 = ssub.s32 1, %s5
  %s8 = scalar_select 0, %s7, %s5
  $region1: #{tpu_custom_call.1} parent=0
    #allocation2 [shape = 'u8[2048]{0}', space=vmem, size = 0x800, scoped, tag = 'input window, operand 0, single buffered']
    #allocation3 [shape = 's32[1]{0}', space=sflag, size = 0x4, scoped, tag = 'scoped memory for tpu_custom_call.1']
    #allocation4 [shape = 's32[1]{0}', space=sflag, size = 0x4, scoped, tag = 'scoped memory for tpu_custom_call.1']
    #allocation5 [shape = 'u8[2048]{0}', space=vmem, size = 0x800, scoped, tag = 'input window, operand 1, single buffered']
    #allocation6 [shape = 's32[1]{0}', space=sflag, size = 0x4, scoped, tag = 'scoped memory for tpu_custom_call.1']
    #allocation7 [shape = 'u8[512]{0}', space=vmem, size = 0x400, scoped, tag = 'output window, operand 0, single buffered']
    #allocation8 [shape = 'u8[512]{0}', space=vmem, size = 0x400, scoped, tag = 'output window, operand 1, single buffered']
    #allocation9 [shape = 's32[1]{0}', space=sflag, size = 0x4, scoped, tag = 'scoped memory for tpu_custom_call.1']
    %9 = vsyncpa [#allocation3], 0
    %10 = vsyncpa [#allocation6], 0
    %11 = vsyncpa [#allocation4], 0
    %12 = vsyncpa [#allocation9], 0
    // Predicated region
    $region2: #{tpu_custom_call.1} parent=1 // pred_check
      _
    $region3: #{tpu_custom_call.1} parent=1 // pred_check_branch
      %14 = sbr.rel (0) target = $region5
    $region4: #{tpu_custom_call.1} parent=1 // pred_region
      %s15 = sadd.s32 0, 0
      %p16 = scmp.lt.s32.totalorder %s15, 0
      %s17 = scalar_select %p16, %s15, 0
      %19 = vsyncadd [#allocation3], 0
      %s20 = smul.addr %s17, 4
      %s21 = scalar_lea.hbm %s0, %s20
      %s23 = sshll.u32 %s21, 4
      %s24 = int_to_ptr.hbm [resolvable:$true] %s23
      %s25 = sshll.u32 [#allocation2], 4
      %s26 = int_to_ptr.vmem [resolvable:$true] %s25
      %28 = dma.hbm_to_vmem [thread:$0]  %s24, 64, %s26, [#allocation3]
    $region5: #{tpu_custom_call.1} parent=1 // pred_fallthru
      _
    // Predicated region
    $region6: #{tpu_custom_call.1} parent=1 // pred_check
      _
    $region7: #{tpu_custom_call.1} parent=1 // pred_check_branch
      %30 = sbr.rel (0) target = $region9
    $region8: #{tpu_custom_call.1} parent=1 // pred_region
      %s31 = sadd.s32 0, 0
      %p32 = scmp.lt.s32.totalorder %s31, 0
      %s33 = scalar_select %p32, %s31, 0
      %35 = vsyncadd [#allocation6], 0
      %s36 = smul.addr %s33, 4
      %s37 = scalar_lea.hbm %s1, %s36
      %s39 = sshll.u32 %s37, 4
      %s40 = int_to_ptr.hbm [resolvable:$true] %s39
      %s41 = sshll.u32 [#allocation5], 4
      %s42 = int_to_ptr.vmem [resolvable:$true] %s41
      %44 = dma.hbm_to_vmem [thread:$0]  %s40, 64, %s42, [#allocation6]
    $region9: #{tpu_custom_call.1} parent=1 // pred_fallthru
      _
    // Predicated region
    $region10: #{tpu_custom_call.1} parent=1 // pred_check
      _
    $region11: #{tpu_custom_call.1} parent=1 // pred_check_branch
      %46 = sbr.rel (0) target = $region13
    $region12: #{tpu_custom_call.1} parent=1 // pred_region
      %48 = dma.done [#allocation3], 64
    $region13: #{tpu_custom_call.1} parent=1 // pred_fallthru
      _
    // Predicated region
    $region14: #{tpu_custom_call.1} parent=1 // pred_check
      _
    $region15: #{tpu_custom_call.1} parent=1 // pred_check_branch
      %50 = sbr.rel (0) target = $region17
    $region16: #{tpu_custom_call.1} parent=1 // pred_region
      %52 = dma.done [#allocation6], 64
    $region17: #{tpu_custom_call.1} parent=1 // pred_fallthru
      _
    %s53 = sadd.s32 0, 0
    %p54 = scmp.lt.s32.totalorder %s53, 0
    %s55 = scalar_select %p54, %s53, 0
    %s56 = sadd.s32 0, 0
    %p57 = scmp.lt.s32.totalorder %s56, 0
    %s58 = scalar_select %p57, %s56, 0
    %p59 = scmp.eq.s32.totalorder 0, 0
    // Predicated region
    $region18: #{tpu_custom_call.1} parent=1 // pred_check
      %p60 = pneg %p59
    $region19: #{tpu_custom_call.1} parent=1 // pred_check_branch
      %62 = sbr.rel (%p60) target = $region21
    $region20: #{tpu_custom_call.1} parent=1 // pred_region
      %63 = vst [vmem:[#allocation7] sm:$0x1] 0.0
      %64 = vst [vmem:[#allocation8] sm:$0x1] 0.0
    $region21: #{tpu_custom_call.1} parent=1 // pred_fallthru
      _
    %v65 = vld [vmem:[#allocation2] sm:$0xf]
    %v66 = vxor.u32 %v65, 2147483648
    %v67 = vmul.f32 %v66, 1.442695
    %v68 = vpow.pop %v67
    %v69 = vadd.f32 %v68, 1.0
    %v70 = vrcp.pop %v69
    %v71 = vmul.f32 %v69, %v70
    %v72 = vsub.f32 1.0, %v71
    %v73 = vmul.f32 %v70, %v72
    %v74 = vadd.f32 %v70, %v73
    %vm75 = vweird.f32 %v69
    %vm76 = vweird.f32 %v70
    %vm77 = vmor %vm75, %vm76
    %v78 = vsel %vm77, %v70, %v74
    %v79 = vand.u32 2147483647, %v69
    %vm80 = vcmp.eq.f32.partialorder %v79, 8.507059e+37
    %v81 = vand.u32 %v69, 2147483648
    %v82 = vor.u32 1.1754944e-38, %v81
    %v83 = vsel %vm80, %v82, %v78
    %v84 = vmul.f32 1.0, %v83
    %v85 = vld [vmem:[#allocation5] sm:$0xf]
    %v86 = vmul.f32 %v84, %v85
    %vm87 = vcmask 1043456
    %v88 = vsel %vm87, %v86, 0.0
    %v89 = vrot.slane %v88, 4
    %v90 = vadd.f32 %v88, %v89
    %v91 = vrot.slane %v90, 2
    %v92 = vadd.f32 %v90, %v91
    %v93 = vrot.slane %v92, 1
    %v94 = vadd.f32 %v92, %v93
    %v95 = vadd.f32 %v84, %v85
    %v96 = vsel %vm87, %v95, 0.0
    %v97 = vrot.slane %v96, 4
    %v98 = vadd.f32 %v96, %v97
    %v99 = vrot.slane %v98, 2
    %v100 = vadd.f32 %v98, %v99
    %v101 = vrot.slane %v100, 1
    %v102 = vadd.f32 %v100, %v101
    %v103 = vld [vmem:[#allocation7] sm:$0x1]
    %v104 = vadd.f32 %v103, %v94
    %105 = vst [vmem:[#allocation7] sm:$0x1] %v104
    %v106 = vld [vmem:[#allocation8] sm:$0x1]
    %v107 = vadd.f32 %v106, %v102
    %108 = vst [vmem:[#allocation8] sm:$0x1] %v107
    // Predicated region
    $region22: #{tpu_custom_call.1} parent=1 // pred_check
      _
    $region23: #{tpu_custom_call.1} parent=1 // pred_check_branch
      %110 = sbr.rel (0) target = $region25
    $region24: #{tpu_custom_call.1} parent=1 // pred_region
      %112 = vsyncadd [#allocation4], 0
      %s114 = sshll.u32 [#allocation7], 4
      %s115 = int_to_ptr.vmem [resolvable:$true] %s114
      %s116 = sshll.u32 %s2, 4
      %s117 = int_to_ptr.hbm [resolvable:$true] %s116
      %119 = dma.vmem_to_hbm [thread:$0]  %s115, 16, %s117, [#allocation4]
    $region25: #{tpu_custom_call.1} parent=1 // pred_fallthru
      _
    // Predicated region
    $region26: #{tpu_custom_call.1} parent=1 // pred_check
      _
    $region27: #{tpu_custom_call.1} parent=1 // pred_check_branch
      %121 = sbr.rel (0) target = $region29
    $region28: #{tpu_custom_call.1} parent=1 // pred_region
      %123 = vsyncadd [#allocation9], 0
      %s125 = sshll.u32 [#allocation8], 4
      %s126 = int_to_ptr.vmem [resolvable:$true] %s125
      %s127 = sshll.u32 %s3, 4
      %s128 = int_to_ptr.hbm [resolvable:$true] %s127
      %130 = dma.vmem_to_hbm [thread:$0]  %s126, 16, %s128, [#allocation9]
    $region29: #{tpu_custom_call.1} parent=1 // pred_fallthru
      _
    // Predicated region
    $region30: #{tpu_custom_call.1} parent=1 // pred_check
      _
    $region31: #{tpu_custom_call.1} parent=1 // pred_check_branch
      %132 = sbr.rel (0) target = $region33
    $region32: #{tpu_custom_call.1} parent=1 // pred_region
      %134 = dma.done [#allocation4], 16
    $region33: #{tpu_custom_call.1} parent=1 // pred_fallthru
      _
    // Predicated region
    $region34: #{tpu_custom_call.1} parent=1 // pred_check
      _
    $region35: #{tpu_custom_call.1} parent=1 // pred_check_branch
      %136 = sbr.rel (0) target = $region37
    $region36: #{tpu_custom_call.1} parent=1 // pred_region
      %138 = dma.done [#allocation9], 16
    $region37: #{tpu_custom_call.1} parent=1 // pred_fallthru
      _
    %139 = vsyncpa [#allocation3], 1
    %140 = vsyncpa [#allocation6], 1
    %141 = vsyncpa [#allocation4], 1
    %142 = vsyncpa [#allocation9], 1

</llo_original>
